<compile_context>
chip_gen: v5e
topology: v5e:2x2
jax: 0.10.0
libtpu: 0.0.40
codegen_flags: <defaults>
</compile_context>

<pallas_src>
import jax
import jax.numpy as jnp
from jax.experimental import pallas as pl
from jax.experimental.pallas import tpu as pltpu

BN_EPS = 1e-5
LANE = 128
SUBLANE = 8


def _round_up(n, m):
    return ((n + m - 1) // m) * m


def _pad2(a, rows, cols):
    """Zero-pad a 2D array up to (rows, cols)."""
    r, c = a.shape
    return jnp.pad(a, ((0, rows - r), (0, cols - c)))


# --------------------------- packed parameter slab ---------------------------

class _ParamSlab:
    """Packs every (zero-padded) parameter into one [R, 128] f32 slab.

    All row offsets / row counts are multiples of 8 (sublane tile) and the lane
    width is exactly 128, so every static slice taken inside the kernel is a
    tile-aligned VMEM view and the whole parameter set is one contiguous DMA.
    """

    def __init__(self):
        self._blocks = []
        self._rows = 0

    def add(self, arr, rows_pad):
        assert rows_pad % SUBLANE == 0 and rows_pad >= arr.shape[0]
        assert arr.shape[1] <= LANE
        off = self._rows
        self._blocks.append(_pad2(arr, rows_pad, LANE))
        self._rows += rows_pad
        return off

    def finalize(self):
        return jnp.concatenate(self._blocks, axis=0)


def _build_chain(key, slab, layer_sizes, last_plain, first_seg_rows):
    """Build padded params + metadata for one DenseBlock chain.

    DenseBlock = Linear -> BatchNorm1d -> ReLU; the last block is optionally
    "plain" (Linear + bias only: activation_last=False, bn_last=False).

    first_seg_rows: list of (real_rows, padded_rows) for splitting the first
    Linear's weight, which implements torch.cat([a, b], dim=1) as a@Wa + b@Wb.
    The padded row count of each segment must equal the padded lane width of
    the corresponding input operand so the matmul contraction dims line up.
    """
    meta = []
    for i, (fin, fout) in enumerate(layer_sizes):
        assert fout <= LANE, "this layout assumes layer widths <= 128"
        is_last = (i + 1 == len(layer_sizes))
        plain = is_last and last_plain

        if i == 0:
            segs = list(first_seg_rows)
        else:
            prev = layer_sizes[i - 1][1]
            segs = [(prev, _round_up(prev, LANE))]
        assert sum(r for r, _ in segs) == fin

        # Synthetic deterministic init (stands in for weight_init in the module).
        key, kw = jax.random.split(key)
        w = jax.random.normal(kw, (fin, fout), jnp.float32) / jnp.sqrt(float(fin))

        w_entries = []
        row = 0
        for r_real, r_pad in segs:
            off = slab.add(w[row:row + r_real, :], r_pad)
            w_entries.append((off, r_pad))
            row += r_real

        if plain:
            key, kb = jax.random.split(key)
            b = jax.random.normal(kb, (1, fout), jnp.float32) * 0.01
            bias_off = slab.add(b, SUBLANE)
            bn = None
        else:
            # Linear bias is mathematically cancelled by BN mean subtraction: omit it.
            bias_off = None
            g_off = slab.add(jnp.ones((1, fout), jnp.float32), SUBLANE)
            b_off = slab.add(jnp.zeros((1, fout), jnp.float32), SUBLANE)
            bn = (g_off, b_off)

        meta.append(dict(w=tuple(w_entries), bias=bias_off, bn=bn, relu=not plain))
    return meta, key


def build_cvae_params(key, enc_layers, vae_layers, dec_layers, xdim, cdim, latent):
    slab = _ParamSlab()
    enc_meta, key = _build_chain(
        key, slab, enc_layers, last_plain=False,
        first_seg_rows=[(xdim, _round_up(xdim, SUBLANE)), (cdim, _round_up(cdim, SUBLANE))])
    h_real = enc_layers[-1][1]
    h_pad = _round_up(h_real, LANE)
    mu_meta, key = _build_chain(
        key, slab, vae_layers, last_plain=True, first_seg_rows=[(h_real, h_pad)])
    lv_meta, key = _build_chain(
        key, slab, vae_layers, last_plain=True, first_seg_rows=[(h_real, h_pad)])
    latent_pad = _round_up(latent, LANE)
    dec_meta, key = _build_chain(
        key, slab, dec_layers, last_plain=True,
        first_seg_rows=[(latent, latent_pad), (cdim, _round_up(cdim, SUBLANE))])
    return slab.finalize(), (enc_meta, mu_meta, lv_meta, dec_meta)


# ------------------------------ fused kernel --------------------------------

def _make_cvae_kernel(enc_meta, mu_meta, lv_meta, dec_meta):
    def kernel(x_ref, c_ref, eps_ref, p_ref, xhat_ref, mu_ref, lv_ref):
        x = x_ref[...]        # [B, XDIM]
        c = c_ref[...]        # [B, CDIM]
        eps = eps_ref[...]    # [B, LATENT_pad] (zero-padded standard normal)

        def vec(off):                      # (1, 128) row vector from the slab
            return p_ref[off:off + 1, :]

        def run_chain(first_inputs, meta):
            h = None
            for blk in meta:
                srcs = first_inputs if h is None else [h]
                assert len(srcs) == len(blk["w"])  # trace-time sanity check
                # Linear: sum of per-segment matmuls (in-VMEM "concat").
                y = None
                for s, (off, rows) in zip(srcs, blk["w"]):
                    w = p_ref[off:off + rows, :]   # tile-aligned static VMEM view
                    part = jnp.dot(s, w, preferred_element_type=jnp.float32)
                    y = part if y is None else y + part
                if blk["bias"] is not None:        # only plain (no-BN) blocks
                    y = y + vec(blk["bias"])
                if blk["bn"] is not None:
                    g_off, b_off = blk["bn"]
                    # One-pass training-mode batch stats (biased variance).
                    inv_n = 1.0 / y.shape[0]
                    mean = jnp.sum(y, axis=0, keepdims=True) * inv_n
                    ex2 = jnp.sum(y * y, axis=0, keepdims=True) * inv_n
                    var = ex2 - mean * mean
                    y = (y - mean) * jax.lax.rsqrt(var + BN_EPS)
                    y = y * vec(g_off) + vec(b_off)
                if blk["relu"]:
                    y = jnp.maximum(y, 0.0)
                h = y
            return h

        # encoder: cat([x, c]) -> encoder_net (concat done as split matmuls)
        h = run_chain([x, c], enc_meta)
        # mu / log_var heads (independent chains sharing h, fused in this call)
        mu = run_chain([h], mu_meta)
        log_var = run_chain([h], lv_meta)
        # reparameterization: z = mu + eps * exp(0.5 * log_var)
        z = mu + eps * jnp.exp(0.5 * log_var)
        # decoder: cat([z, c]) -> decoder_net
        x_hat = run_chain([z, c], dec_meta)
        # TODO(synk): get_activation(activation_last=None) treated as identity.

        xhat_ref[...] = x_hat
        mu_ref[...] = mu
        lv_ref[...] = log_var

    return kernel


# -------------------------------- forward -----------------------------------

def cvae_forward(x, c, eps_pad, param_slab, metas, xdim, latent):
    """Run the fused CVAE forward. Returns (x_hat, mu, log_var) at real widths."""
    B = x.shape[0]
    xdim_pad = _round_up(xdim, LANE)
    latent_pad = _round_up(latent, LANE)

    kernel = _make_cvae_kernel(*metas)
    out_shape = (
        jax.ShapeDtypeStruct((B, xdim_pad), jnp.float32),
        jax.ShapeDtypeStruct((B, latent_pad), jnp.float32),
        jax.ShapeDtypeStruct((B, latent_pad), jnp.float32),
    )
    x_hat_p, mu_p, lv_p = pl.pallas_call(
        kernel,
        out_shape=out_shape,
        grid=(1,),
        in_specs=[
            pl.BlockSpec(x.shape, lambda i: (0, 0)),
            pl.BlockSpec(c.shape, lambda i: (0, 0)),
            pl.BlockSpec(eps_pad.shape, lambda i: (0, 0)),
            pl.BlockSpec(param_slab.shape, lambda i: (0, 0)),
        ],
        out_specs=(
            pl.BlockSpec((B, xdim_pad), lambda i: (0, 0)),
            pl.BlockSpec((B, latent_pad), lambda i: (0, 0)),
            pl.BlockSpec((B, latent_pad), lambda i: (0, 0)),
        ),
        compiler_params=pltpu.CompilerParams(dimension_semantics=("arbitrary",)),
    )(x, c, eps_pad, param_slab)

    # Slice real columns once, at the very end (outputs are lane-dense in HBM).
    return x_hat_p[:, :xdim], mu_p[:, :latent], lv_p[:, :latent]


# ------------------------- pure-JAX reference (check) ------------------------

def _forward_ref(x, c, eps_pad, slab, metas, xdim, latent):
    """Same math as the kernel, replayed with plain jnp on the padded slab."""
    enc_meta, mu_meta, lv_meta, dec_meta = metas

    def vec(off):
        return slab[off:off + 1, :]

    def run_chain(first_inputs, meta):
        h = None
        for blk in meta:
            srcs = first_inputs if h is None else [h]
            y = None
            for s, (off, rows) in zip(srcs, blk["w"]):
                part = jnp.dot(s, slab[off:off + rows, :],
                               preferred_element_type=jnp.float32,
                               precision=jax.lax.Precision.HIGHEST)
                y = part if y is None else y + part
            if blk["bias"] is not None:
                y = y + vec(blk["bias"])
            if blk["bn"] is not None:
                g_off, b_off = blk["bn"]
                mean = jnp.mean(y, axis=0, keepdims=True)
                var = jnp.mean(y * y, axis=0, keepdims=True) - mean * mean
                y = (y - mean) * jax.lax.rsqrt(var + BN_EPS)
                y = y * vec(g_off) + vec(b_off)
            if blk["relu"]:
                y = jnp.maximum(y, 0.0)
            h = y
        return h

    h = run_chain([x, c], enc_meta)
    mu = run_chain([h], mu_meta)
    log_var = run_chain([h], lv_meta)
    z = mu + eps_pad * jnp.exp(0.5 * log_var)
    x_hat = run_chain([z, c], dec_meta)
    return x_hat[:, :xdim], mu[:, :latent], log_var[:, :latent]


# ---------------------------------- main -------------------------------------

if __name__ == "__main__":
    key = jax.random.PRNGKey(0)
    B, XDIM, CDIM, LATENT = 8, 16, 16, 16
    latent_pad = _round_up(LATENT, LANE)

    kx, kc, keps, kparam = jax.random.split(key, 4)
    x = jax.random.normal(kx, (B, XDIM), jnp.float32)
    c = jax.random.normal(kc, (B, CDIM), jnp.float32)
    eps = jax.random.normal(keps, (B, LATENT), jnp.float32)   # torch.randn_like stand-in
    eps_pad = jnp.pad(eps, ((0, 0), (0, latent_pad - LATENT)))

    # Layer configuration consistent with the module's constructor arguments.
    enc_layers = [[XDIM + CDIM, 64], [64, 64]]
    vae_layers = [[64, 32], [32, LATENT]]
    dec_layers = [[LATENT + CDIM, 64], [64, XDIM]]

    param_slab, metas = build_cvae_params(
        kparam, enc_layers, vae_layers, dec_layers, XDIM, CDIM, LATENT)

    x_hat, mu, log_var = cvae_forward(x, c, eps_pad, param_slab, metas, XDIM, LATENT)
    jax.block_until_ready((x_hat, mu, log_var))

    assert x_hat.shape == (B, XDIM)
    assert mu.shape == (B, LATENT)
    assert log_var.shape == (B, LATENT)
    for a in (x_hat, mu, log_var):
        assert bool(jnp.all(jnp.isfinite(a)))

    # Structural-correctness check against a pure-JAX replay of the same math
    # (loose tolerance: only matmul rounding differs between MXU and XLA).
    rxh, rmu, rlv = _forward_ref(x, c, eps_pad, param_slab, metas, XDIM, LATENT)
    assert bool(jnp.allclose(x_hat, rxh, rtol=5e-2, atol=5e-2))
    assert bool(jnp.allclose(mu, rmu, rtol=5e-2, atol=5e-2))
    assert bool(jnp.allclose(log_var, rlv, rtol=5e-2, atol=5e-2))

    print("KERNEL_OK")
</pallas_src>

<mosaic_0001>
module attributes {stable_mosaic.version = 11 : i64} {
  func.func @kernel(%arg0: i32, %arg1: memref<8x16xf32, #tpu.memory_space<vmem>>, %arg2: memref<8x16xf32, #tpu.memory_space<vmem>>, %arg3: memref<8x128xf32, #tpu.memory_space<vmem>>, %arg4: memref<1048x128xf32, #tpu.memory_space<vmem>>, %arg5: memref<8x128xf32, #tpu.memory_space<vmem>>, %arg6: memref<8x128xf32, #tpu.memory_space<vmem>>, %arg7: memref<8x128xf32, #tpu.memory_space<vmem>>) attributes {dimension_semantics = [#tpu.dimension_semantics<arbitrary>], iteration_bounds = array<i64: 1>, scalar_prefetch = 0 : i64, scratch_operands = 0 : i64, tpu.core_type = #tpu.core_type<tc>, window_params = [{pipeline_mode = #tpu.pipeline_mode<synchronous>, transform_indices = @transform_0, window_bounds = array<i64: 8, 16>}, {pipeline_mode = #tpu.pipeline_mode<synchronous>, transform_indices = @transform_1, window_bounds = array<i64: 8, 16>}, {pipeline_mode = #tpu.pipeline_mode<synchronous>, transform_indices = @transform_2, window_bounds = array<i64: 8, 128>}, {pipeline_mode = #tpu.pipeline_mode<synchronous>, transform_indices = @transform_3, window_bounds = array<i64: 1048, 128>}, {pipeline_mode = #tpu.pipeline_mode<synchronous>, transform_indices = @transform_4, window_bounds = array<i64: 8, 128>}, {pipeline_mode = #tpu.pipeline_mode<synchronous>, transform_indices = @transform_5, window_bounds = array<i64: 8, 128>}, {pipeline_mode = #tpu.pipeline_mode<synchronous>, transform_indices = @transform_6, window_bounds = array<i64: 8, 128>}]} {
    %c0 = arith.constant 0 : index
    %c0_0 = arith.constant 0 : index
    %0 = vector.load %arg1[%c0, %c0_0] : memref<8x16xf32, #tpu.memory_space<vmem>>, vector<8x16xf32>
    %c0_1 = arith.constant 0 : index
    %c0_2 = arith.constant 0 : index
    %1 = vector.load %arg2[%c0_1, %c0_2] : memref<8x16xf32, #tpu.memory_space<vmem>>, vector<8x16xf32>
    %c0_3 = arith.constant 0 : index
    %c0_4 = arith.constant 0 : index
    %2 = vector.load %arg3[%c0_3, %c0_4] : memref<8x128xf32, #tpu.memory_space<vmem>>, vector<8x128xf32>
    %c0_5 = arith.constant 0 : index
    %c0_6 = arith.constant 0 : index
    %3 = vector.load %arg4[%c0_5, %c0_6] : memref<1048x128xf32, #tpu.memory_space<vmem>>, vector<16x128xf32>
    %cst = arith.constant dense<0.000000e+00> : vector<8x128xf32>
    %4 = tpu.matmul %0, %3, %cst {dimension_numbers = #tpu.dot_dimension_numbers<[1], [0], [0], [1], [0, 0, 1, 1], [], []>} : vector<8x16xf32>, vector<16x128xf32>, vector<8x128xf32> -> vector<8x128xf32>
    %c16 = arith.constant 16 : index
    %c0_7 = arith.constant 0 : index
    %5 = vector.load %arg4[%c16, %c0_7] : memref<1048x128xf32, #tpu.memory_space<vmem>>, vector<16x128xf32>
    %cst_8 = arith.constant dense<0.000000e+00> : vector<8x128xf32>
    %6 = tpu.matmul %1, %5, %cst_8 {dimension_numbers = #tpu.dot_dimension_numbers<[1], [0], [0], [1], [0, 0, 1, 1], [], []>} : vector<8x16xf32>, vector<16x128xf32>, vector<8x128xf32> -> vector<8x128xf32>
    %7 = arith.addf %4, %6 : vector<8x128xf32>
    %cst_9 = arith.constant dense<0.000000e+00> : vector<128xf32>
    %8 = vector.multi_reduction <add>, %7, %cst_9 [0] : vector<8x128xf32> to vector<128xf32>
    %9 = vector.shape_cast %8 : vector<128xf32> to vector<1x128xf32>
    %cst_10 = arith.constant 1.250000e-01 : f32
    %10 = vector.broadcast %cst_10 : f32 to vector<1x128xf32>
    %11 = arith.mulf %9, %10 : vector<1x128xf32>
    %12 = arith.mulf %7, %7 : vector<8x128xf32>
    %cst_11 = arith.constant dense<0.000000e+00> : vector<128xf32>
    %13 = vector.multi_reduction <add>, %12, %cst_11 [0] : vector<8x128xf32> to vector<128xf32>
    %14 = vector.shape_cast %13 : vector<128xf32> to vector<1x128xf32>
    %cst_12 = arith.constant 1.250000e-01 : f32
    %15 = vector.broadcast %cst_12 : f32 to vector<1x128xf32>
    %16 = arith.mulf %14, %15 : vector<1x128xf32>
    %17 = arith.mulf %11, %11 : vector<1x128xf32>
    %18 = arith.subf %16, %17 : vector<1x128xf32>
    %19 = vector.broadcast %11 : vector<1x128xf32> to vector<8x128xf32>
    %20 = arith.subf %7, %19 : vector<8x128xf32>
    %cst_13 = arith.constant 9.99999974E-6 : f32
    %21 = vector.broadcast %cst_13 : f32 to vector<1x128xf32>
    %22 = arith.addf %18, %21 : vector<1x128xf32>
    %23 = math.rsqrt %22 : vector<1x128xf32>
    %24 = vector.broadcast %23 : vector<1x128xf32> to vector<8x128xf32>
    %25 = arith.mulf %20, %24 : vector<8x128xf32>
    %c32 = arith.constant 32 : index
    %c0_14 = arith.constant 0 : index
    %26 = vector.load %arg4[%c32, %c0_14] : memref<1048x128xf32, #tpu.memory_space<vmem>>, vector<1x128xf32>
    %27 = vector.broadcast %26 : vector<1x128xf32> to vector<8x128xf32>
    %28 = arith.mulf %25, %27 : vector<8x128xf32>
    %c40 = arith.constant 40 : index
    %c0_15 = arith.constant 0 : index
    %29 = vector.load %arg4[%c40, %c0_15] : memref<1048x128xf32, #tpu.memory_space<vmem>>, vector<1x128xf32>
    %30 = vector.broadcast %29 : vector<1x128xf32> to vector<8x128xf32>
    %31 = arith.addf %28, %30 : vector<8x128xf32>
    %cst_16 = arith.constant 0.000000e+00 : f32
    %32 = vector.broadcast %cst_16 : f32 to vector<8x128xf32>
    %33 = arith.maximumf %31, %32 : vector<8x128xf32>
    %c48 = arith.constant 48 : index
    %c0_17 = arith.constant 0 : index
    %34 = vector.load %arg4[%c48, %c0_17] : memref<1048x128xf32, #tpu.memory_space<vmem>>, vector<128x128xf32>
    %cst_18 = arith.constant dense<0.000000e+00> : vector<8x128xf32>
    %35 = tpu.matmul %33, %34, %cst_18 {dimension_numbers = #tpu.dot_dimension_numbers<[1], [0], [0], [1], [0, 0, 1, 1], [], []>} : vector<8x128xf32>, vector<128x128xf32>, vector<8x128xf32> -> vector<8x128xf32>
    %cst_19 = arith.constant dense<0.000000e+00> : vector<128xf32>
    %36 = vector.multi_reduction <add>, %35, %cst_19 [0] : vector<8x128xf32> to vector<128xf32>
    %37 = vector.shape_cast %36 : vector<128xf32> to vector<1x128xf32>
    %cst_20 = arith.constant 1.250000e-01 : f32
    %38 = vector.broadcast %cst_20 : f32 to vector<1x128xf32>
    %39 = arith.mulf %37, %38 : vector<1x128xf32>
    %40 = arith.mulf %35, %35 : vector<8x128xf32>
    %cst_21 = arith.constant dense<0.000000e+00> : vector<128xf32>
    %41 = vector.multi_reduction <add>, %40, %cst_21 [0] : vector<8x128xf32> to vector<128xf32>
    %42 = vector.shape_cast %41 : vector<128xf32> to vector<1x128xf32>
    %cst_22 = arith.constant 1.250000e-01 : f32
    %43 = vector.broadcast %cst_22 : f32 to vector<1x128xf32>
    %44 = arith.mulf %42, %43 : vector<1x128xf32>
    %45 = arith.mulf %39, %39 : vector<1x128xf32>
    %46 = arith.subf %44, %45 : vector<1x128xf32>
    %47 = vector.broadcast %39 : vector<1x128xf32> to vector<8x128xf32>
    %48 = arith.subf %35, %47 : vector<8x128xf32>
    %cst_23 = arith.constant 9.99999974E-6 : f32
    %49 = vector.broadcast %cst_23 : f32 to vector<1x128xf32>
    %50 = arith.addf %46, %49 : vector<1x128xf32>
    %51 = math.rsqrt %50 : vector<1x128xf32>
    %52 = vector.broadcast %51 : vector<1x128xf32> to vector<8x128xf32>
    %53 = arith.mulf %48, %52 : vector<8x128xf32>
    %c176 = arith.constant 176 : index
    %c0_24 = arith.constant 0 : index
    %54 = vector.load %arg4[%c176, %c0_24] : memref<1048x128xf32, #tpu.memory_space<vmem>>, vector<1x128xf32>
    %55 = vector.broadcast %54 : vector<1x128xf32> to vector<8x128xf32>
    %56 = arith.mulf %53, %55 : vector<8x128xf32>
    %c184 = arith.constant 184 : index
    %c0_25 = arith.constant 0 : index
    %57 = vector.load %arg4[%c184, %c0_25] : memref<1048x128xf32, #tpu.memory_space<vmem>>, vector<1x128xf32>
    %58 = vector.broadcast %57 : vector<1x128xf32> to vector<8x128xf32>
    %59 = arith.addf %56, %58 : vector<8x128xf32>
    %cst_26 = arith.constant 0.000000e+00 : f32
    %60 = vector.broadcast %cst_26 : f32 to vector<8x128xf32>
    %61 = arith.maximumf %59, %60 : vector<8x128xf32>
    %c192 = arith.constant 192 : index
    %c0_27 = arith.constant 0 : index
    %62 = vector.load %arg4[%c192, %c0_27] : memref<1048x128xf32, #tpu.memory_space<vmem>>, vector<128x128xf32>
    %cst_28 = arith.constant dense<0.000000e+00> : vector<8x128xf32>
    %63 = tpu.matmul %61, %62, %cst_28 {dimension_numbers = #tpu.dot_dimension_numbers<[1], [0], [0], [1], [0, 0, 1, 1], [], []>} : vector<8x128xf32>, vector<128x128xf32>, vector<8x128xf32> -> vector<8x128xf32>
    %cst_29 = arith.constant dense<0.000000e+00> : vector<128xf32>
    %64 = vector.multi_reduction <add>, %63, %cst_29 [0] : vector<8x128xf32> to vector<128xf32>
    %65 = vector.shape_cast %64 : vector<128xf32> to vector<1x128xf32>
    %cst_30 = arith.constant 1.250000e-01 : f32
    %66 = vector.broadcast %cst_30 : f32 to vector<1x128xf32>
    %67 = arith.mulf %65, %66 : vector<1x128xf32>
    %68 = arith.mulf %63, %63 : vector<8x128xf32>
    %cst_31 = arith.constant dense<0.000000e+00> : vector<128xf32>
    %69 = vector.multi_reduction <add>, %68, %cst_31 [0] : vector<8x128xf32> to vector<128xf32>
    %70 = vector.shape_cast %69 : vector<128xf32> to vector<1x128xf32>
    %cst_32 = arith.constant 1.250000e-01 : f32
    %71 = vector.broadcast %cst_32 : f32 to vector<1x128xf32>
    %72 = arith.mulf %70, %71 : vector<1x128xf32>
    %73 = arith.mulf %67, %67 : vector<1x128xf32>
    %74 = arith.subf %72, %73 : vector<1x128xf32>
    %75 = vector.broadcast %67 : vector<1x128xf32> to vector<8x128xf32>
    %76 = arith.subf %63, %75 : vector<8x128xf32>
    %cst_33 = arith.constant 9.99999974E-6 : f32
    %77 = vector.broadcast %cst_33 : f32 to vector<1x128xf32>
    %78 = arith.addf %74, %77 : vector<1x128xf32>
    %79 = math.rsqrt %78 : vector<1x128xf32>
    %80 = vector.broadcast %79 : vector<1x128xf32> to vector<8x128xf32>
    %81 = arith.mulf %76, %80 : vector<8x128xf32>
    %c320 = arith.constant 320 : index
    %c0_34 = arith.constant 0 : index
    %82 = vector.load %arg4[%c320, %c0_34] : memref<1048x128xf32, #tpu.memory_space<vmem>>, vector<1x128xf32>
    %83 = vector.broadcast %82 : vector<1x128xf32> to vector<8x128xf32>
    %84 = arith.mulf %81, %83 : vector<8x128xf32>
    %c328 = arith.constant 328 : index
    %c0_35 = arith.constant 0 : index
    %85 = vector.load %arg4[%c328, %c0_35] : memref<1048x128xf32, #tpu.memory_space<vmem>>, vector<1x128xf32>
    %86 = vector.broadcast %85 : vector<1x128xf32> to vector<8x128xf32>
    %87 = arith.addf %84, %86 : vector<8x128xf32>
    %cst_36 = arith.constant 0.000000e+00 : f32
    %88 = vector.broadcast %cst_36 : f32 to vector<8x128xf32>
    %89 = arith.maximumf %87, %88 : vector<8x128xf32>
    %c336 = arith.constant 336 : index
    %c0_37 = arith.constant 0 : index
    %90 = vector.load %arg4[%c336, %c0_37] : memref<1048x128xf32, #tpu.memory_space<vmem>>, vector<128x128xf32>
    %cst_38 = arith.constant dense<0.000000e+00> : vector<8x128xf32>
    %91 = tpu.matmul %89, %90, %cst_38 {dimension_numbers = #tpu.dot_dimension_numbers<[1], [0], [0], [1], [0, 0, 1, 1], [], []>} : vector<8x128xf32>, vector<128x128xf32>, vector<8x128xf32> -> vector<8x128xf32>
    %c464 = arith.constant 464 : index
    %c0_39 = arith.constant 0 : index
    %92 = vector.load %arg4[%c464, %c0_39] : memref<1048x128xf32, #tpu.memory_space<vmem>>, vector<1x128xf32>
    %93 = vector.broadcast %92 : vector<1x128xf32> to vector<8x128xf32>
    %94 = arith.addf %91, %93 : vector<8x128xf32>
    %c472 = arith.constant 472 : index
    %c0_40 = arith.constant 0 : index
    %95 = vector.load %arg4[%c472, %c0_40] : memref<1048x128xf32, #tpu.memory_space<vmem>>, vector<128x128xf32>
    %cst_41 = arith.constant dense<0.000000e+00> : vector<8x128xf32>
    %96 = tpu.matmul %61, %95, %cst_41 {dimension_numbers = #tpu.dot_dimension_numbers<[1], [0], [0], [1], [0, 0, 1, 1], [], []>} : vector<8x128xf32>, vector<128x128xf32>, vector<8x128xf32> -> vector<8x128xf32>
    %cst_42 = arith.constant dense<0.000000e+00> : vector<128xf32>
    %97 = vector.multi_reduction <add>, %96, %cst_42 [0] : vector<8x128xf32> to vector<128xf32>
    %98 = vector.shape_cast %97 : vector<128xf32> to vector<1x128xf32>
    %cst_43 = arith.constant 1.250000e-01 : f32
    %99 = vector.broadcast %cst_43 : f32 to vector<1x128xf32>
    %100 = arith.mulf %98, %99 : vector<1x128xf32>
    %101 = arith.mulf %96, %96 : vector<8x128xf32>
    %cst_44 = arith.constant dense<0.000000e+00> : vector<128xf32>
    %102 = vector.multi_reduction <add>, %101, %cst_44 [0] : vector<8x128xf32> to vector<128xf32>
    %103 = vector.shape_cast %102 : vector<128xf32> to vector<1x128xf32>
    %cst_45 = arith.constant 1.250000e-01 : f32
    %104 = vector.broadcast %cst_45 : f32 to vector<1x128xf32>
    %105 = arith.mulf %103, %104 : vector<1x128xf32>
    %106 = arith.mulf %100, %100 : vector<1x128xf32>
    %107 = arith.subf %105, %106 : vector<1x128xf32>
    %108 = vector.broadcast %100 : vector<1x128xf32> to vector<8x128xf32>
    %109 = arith.subf %96, %108 : vector<8x128xf32>
    %cst_46 = arith.constant 9.99999974E-6 : f32
    %110 = vector.broadcast %cst_46 : f32 to vector<1x128xf32>
    %111 = arith.addf %107, %110 : vector<1x128xf32>
    %112 = math.rsqrt %111 : vector<1x128xf32>
    %113 = vector.broadcast %112 : vector<1x128xf32> to vector<8x128xf32>
    %114 = arith.mulf %109, %113 : vector<8x128xf32>
    %c600 = arith.constant 600 : index
    %c0_47 = arith.constant 0 : index
    %115 = vector.load %arg4[%c600, %c0_47] : memref<1048x128xf32, #tpu.memory_space<vmem>>, vector<1x128xf32>
    %116 = vector.broadcast %115 : vector<1x128xf32> to vector<8x128xf32>
    %117 = arith.mulf %114, %116 : vector<8x128xf32>
    %c608 = arith.constant 608 : index
    %c0_48 = arith.constant 0 : index
    %118 = vector.load %arg4[%c608, %c0_48] : memref<1048x128xf32, #tpu.memory_space<vmem>>, vector<1x128xf32>
    %119 = vector.broadcast %118 : vector<1x128xf32> to vector<8x128xf32>
    %120 = arith.addf %117, %119 : vector<8x128xf32>
    %cst_49 = arith.constant 0.000000e+00 : f32
    %121 = vector.broadcast %cst_49 : f32 to vector<8x128xf32>
    %122 = arith.maximumf %120, %121 : vector<8x128xf32>
    %c616 = arith.constant 616 : index
    %c0_50 = arith.constant 0 : index
    %123 = vector.load %arg4[%c616, %c0_50] : memref<1048x128xf32, #tpu.memory_space<vmem>>, vector<128x128xf32>
    %cst_51 = arith.constant dense<0.000000e+00> : vector<8x128xf32>
    %124 = tpu.matmul %122, %123, %cst_51 {dimension_numbers = #tpu.dot_dimension_numbers<[1], [0], [0], [1], [0, 0, 1, 1], [], []>} : vector<8x128xf32>, vector<128x128xf32>, vector<8x128xf32> -> vector<8x128xf32>
    %c744 = arith.constant 744 : index
    %c0_52 = arith.constant 0 : index
    %125 = vector.load %arg4[%c744, %c0_52] : memref<1048x128xf32, #tpu.memory_space<vmem>>, vector<1x128xf32>
    %126 = vector.broadcast %125 : vector<1x128xf32> to vector<8x128xf32>
    %127 = arith.addf %124, %126 : vector<8x128xf32>
    %cst_53 = arith.constant 5.000000e-01 : f32
    %128 = vector.broadcast %cst_53 : f32 to vector<8x128xf32>
    %129 = arith.mulf %128, %127 : vector<8x128xf32>
    %130 = math.exp %129 : vector<8x128xf32>
    %131 = arith.mulf %2, %130 : vector<8x128xf32>
    %132 = arith.addf %94, %131 : vector<8x128xf32>
    %c752 = arith.constant 752 : index
    %c0_54 = arith.constant 0 : index
    %133 = vector.load %arg4[%c752, %c0_54] : memref<1048x128xf32, #tpu.memory_space<vmem>>, vector<128x128xf32>
    %cst_55 = arith.constant dense<0.000000e+00> : vector<8x128xf32>
    %134 = tpu.matmul %132, %133, %cst_55 {dimension_numbers = #tpu.dot_dimension_numbers<[1], [0], [0], [1], [0, 0, 1, 1], [], []>} : vector<8x128xf32>, vector<128x128xf32>, vector<8x128xf32> -> vector<8x128xf32>
    %c880 = arith.constant 880 : index
    %c0_56 = arith.constant 0 : index
    %135 = vector.load %arg4[%c880, %c0_56] : memref<1048x128xf32, #tpu.memory_space<vmem>>, vector<16x128xf32>
    %cst_57 = arith.constant dense<0.000000e+00> : vector<8x128xf32>
    %136 = tpu.matmul %1, %135, %cst_57 {dimension_numbers = #tpu.dot_dimension_numbers<[1], [0], [0], [1], [0, 0, 1, 1], [], []>} : vector<8x16xf32>, vector<16x128xf32>, vector<8x128xf32> -> vector<8x128xf32>
    %137 = arith.addf %134, %136 : vector<8x128xf32>
    %cst_58 = arith.constant dense<0.000000e+00> : vector<128xf32>
    %138 = vector.multi_reduction <add>, %137, %cst_58 [0] : vector<8x128xf32> to vector<128xf32>
    %139 = vector.shape_cast %138 : vector<128xf32> to vector<1x128xf32>
    %cst_59 = arith.constant 1.250000e-01 : f32
    %140 = vector.broadcast %cst_59 : f32 to vector<1x128xf32>
    %141 = arith.mulf %139, %140 : vector<1x128xf32>
    %142 = arith.mulf %137, %137 : vector<8x128xf32>
    %cst_60 = arith.constant dense<0.000000e+00> : vector<128xf32>
    %143 = vector.multi_reduction <add>, %142, %cst_60 [0] : vector<8x128xf32> to vector<128xf32>
    %144 = vector.shape_cast %143 : vector<128xf32> to vector<1x128xf32>
    %cst_61 = arith.constant 1.250000e-01 : f32
    %145 = vector.broadcast %cst_61 : f32 to vector<1x128xf32>
    %146 = arith.mulf %144, %145 : vector<1x128xf32>
    %147 = arith.mulf %141, %141 : vector<1x128xf32>
    %148 = arith.subf %146, %147 : vector<1x128xf32>
    %149 = vector.broadcast %141 : vector<1x128xf32> to vector<8x128xf32>
    %150 = arith.subf %137, %149 : vector<8x128xf32>
    %cst_62 = arith.constant 9.99999974E-6 : f32
    %151 = vector.broadcast %cst_62 : f32 to vector<1x128xf32>
    %152 = arith.addf %148, %151 : vector<1x128xf32>
    %153 = math.rsqrt %152 : vector<1x128xf32>
    %154 = vector.broadcast %153 : vector<1x128xf32> to vector<8x128xf32>
    %155 = arith.mulf %150, %154 : vector<8x128xf32>
    %c896 = arith.constant 896 : index
    %c0_63 = arith.constant 0 : index
    %156 = vector.load %arg4[%c896, %c0_63] : memref<1048x128xf32, #tpu.memory_space<vmem>>, vector<1x128xf32>
    %157 = vector.broadcast %156 : vector<1x128xf32> to vector<8x128xf32>
    %158 = arith.mulf %155, %157 : vector<8x128xf32>
    %c904 = arith.constant 904 : index
    %c0_64 = arith.constant 0 : index
    %159 = vector.load %arg4[%c904, %c0_64] : memref<1048x128xf32, #tpu.memory_space<vmem>>, vector<1x128xf32>
    %160 = vector.broadcast %159 : vector<1x128xf32> to vector<8x128xf32>
    %161 = arith.addf %158, %160 : vector<8x128xf32>
    %cst_65 = arith.constant 0.000000e+00 : f32
    %162 = vector.broadcast %cst_65 : f32 to vector<8x128xf32>
    %163 = arith.maximumf %161, %162 : vector<8x128xf32>
    %c912 = arith.constant 912 : index
    %c0_66 = arith.constant 0 : index
    %164 = vector.load %arg4[%c912, %c0_66] : memref<1048x128xf32, #tpu.memory_space<vmem>>, vector<128x128xf32>
    %cst_67 = arith.constant dense<0.000000e+00> : vector<8x128xf32>
    %165 = tpu.matmul %163, %164, %cst_67 {dimension_numbers = #tpu.dot_dimension_numbers<[1], [0], [0], [1], [0, 0, 1, 1], [], []>} : vector<8x128xf32>, vector<128x128xf32>, vector<8x128xf32> -> vector<8x128xf32>
    %c1040 = arith.constant 1040 : index
    %c0_68 = arith.constant 0 : index
    %166 = vector.load %arg4[%c1040, %c0_68] : memref<1048x128xf32, #tpu.memory_space<vmem>>, vector<1x128xf32>
    %167 = vector.broadcast %166 : vector<1x128xf32> to vector<8x128xf32>
    %168 = arith.addf %165, %167 : vector<8x128xf32>
    %c0_69 = arith.constant 0 : index
    %c0_70 = arith.constant 0 : index
    %169 = vector.load %arg5[%c0_69, %c0_70] : memref<8x128xf32, #tpu.memory_space<vmem>>, vector<8x128xf32>
    tpu.vector_store %arg5[%c0_69, %c0_70], %168 {strides = array<i32>} : memref<8x128xf32, #tpu.memory_space<vmem>>, vector<8x128xf32>,
    %c0_71 = arith.constant 0 : index
    %c0_72 = arith.constant 0 : index
    %170 = vector.load %arg6[%c0_71, %c0_72] : memref<8x128xf32, #tpu.memory_space<vmem>>, vector<8x128xf32>
    tpu.vector_store %arg6[%c0_71, %c0_72], %94 {strides = array<i32>} : memref<8x128xf32, #tpu.memory_space<vmem>>, vector<8x128xf32>,
    %c0_73 = arith.constant 0 : index
    %c0_74 = arith.constant 0 : index
    %171 = vector.load %arg7[%c0_73, %c0_74] : memref<8x128xf32, #tpu.memory_space<vmem>>, vector<8x128xf32>
    tpu.vector_store %arg7[%c0_73, %c0_74], %127 {strides = array<i32>} : memref<8x128xf32, #tpu.memory_space<vmem>>, vector<8x128xf32>,
    return
  }
  func.func @transform_0(%arg0: i32) -> (i32, i32) {
    %c0_i32 = arith.constant 0 : i32
    %c0_i32_0 = arith.constant 0 : i32
    %c0_i32_1 = arith.constant 0 : i32
    return %c0_i32, %c0_i32_0 : i32, i32
  }
  func.func @transform_1(%arg0: i32) -> (i32, i32) {
    %c0_i32 = arith.constant 0 : i32
    %c0_i32_0 = arith.constant 0 : i32
    %c0_i32_1 = arith.constant 0 : i32
    return %c0_i32, %c0_i32_0 : i32, i32
  }
  func.func @transform_2(%arg0: i32) -> (i32, i32) {
    %c0_i32 = arith.constant 0 : i32
    %c0_i32_0 = arith.constant 0 : i32
    %c0_i32_1 = arith.constant 0 : i32
    return %c0_i32, %c0_i32_0 : i32, i32
  }
  func.func @transform_3(%arg0: i32) -> (i32, i32) {
    %c0_i32 = arith.constant 0 : i32
    %c0_i32_0 = arith.constant 0 : i32
    %c0_i32_1 = arith.constant 0 : i32
    return %c0_i32, %c0_i32_0 : i32, i32
  }
  func.func @transform_4(%arg0: i32) -> (i32, i32) {
    %c0_i32 = arith.constant 0 : i32
    %c0_i32_0 = arith.constant 0 : i32
    %c0_i32_1 = arith.constant 0 : i32
    return %c0_i32, %c0_i32_0 : i32, i32
  }
  func.func @transform_5(%arg0: i32) -> (i32, i32) {
    %c0_i32 = arith.constant 0 : i32
    %c0_i32_0 = arith.constant 0 : i32
    %c0_i32_1 = arith.constant 0 : i32
    return %c0_i32, %c0_i32_0 : i32, i32
  }
  func.func @transform_6(%arg0: i32) -> (i32, i32) {
    %c0_i32 = arith.constant 0 : i32
    %c0_i32_0 = arith.constant 0 : i32
    %c0_i32_1 = arith.constant 0 : i32
    return %c0_i32, %c0_i32_0 : i32, i32
  }
}

</mosaic_0001>

<llo_original>
// kernel: tpu_custom_call.1
$region0: #{tpu_custom_call.1}
  #allocation0 [shape = 'u32[]', space=smem, size = 0x4, offset = 0x4, fixed_abs, tag = 'smem constant byte address 0x4 - core index']
  #allocation1 [shape = 'u32[72,128]{1,0:T(1,128)}', space=vmem, size = 0x9000, scoped, tag = 'internal scratch']
  %s0 = inlined_call_operand.hbm [shape: f32[8,16], index: 0, kind: input, shape index: {}]
  %s1 = inlined_call_operand.hbm [shape: f32[8,16], index: 1, kind: input, shape index: {}]
  %s2 = inlined_call_operand.hbm [shape: f32[8,128], index: 2, kind: input, shape index: {}]
  %s3 = inlined_call_operand.hbm [shape: f32[1048,128], index: 3, kind: input, shape index: {}]
  %s4 = inlined_call_operand.hbm [shape: f32[8,128], index: 4, kind: output, shape index: {0}]
  %s5 = inlined_call_operand.hbm [shape: f32[8,128], index: 5, kind: output, shape index: {1}]
  %s6 = inlined_call_operand.hbm [shape: f32[8,128], index: 6, kind: output, shape index: {2}]
  %7 = xla_tuple %s4, %s5, %s6
  %s8 = sld [smem:[#allocation0]]
  $region58: #{tpu_custom_call.1} parent=0
    _
  %s10 = ssub.s32 1, %s8
  %s11 = scalar_select 0, %s10, %s8
  $region1: #{tpu_custom_call.1} parent=0
    #allocation2 [shape = 'u8[4096]{0}', space=vmem, size = 0x1000, scoped, tag = 'input window, operand 0, single buffered']
    #allocation3 [shape = 's32[1]{0}', space=sflag, size = 0x4, scoped, tag = 'scoped memory for tpu_custom_call.1']
    #allocation4 [shape = 's32[1]{0}', space=sflag, size = 0x4, scoped, tag = 'scoped memory for tpu_custom_call.1']
    #allocation5 [shape = 'u8[4096]{0}', space=vmem, size = 0x1000, scoped, tag = 'input window, operand 1, single buffered']
    #allocation6 [shape = 's32[1]{0}', space=sflag, size = 0x4, scoped, tag = 'scoped memory for tpu_custom_call.1']
    #allocation7 [shape = 'u8[4096]{0}', space=vmem, size = 0x1000, scoped, tag = 'input window, operand 2, single buffered']
    #allocation8 [shape = 'u8[536576]{0}', space=vmem, size = 0x83000, scoped, tag = 'input window, operand 3, single buffered']
    #allocation9 [shape = 's32[1]{0}', space=sflag, size = 0x4, scoped, tag = 'scoped memory for tpu_custom_call.1']
    #allocation10 [shape = 'u8[4096]{0}', space=vmem, size = 0x1000, scoped, tag = 'output window, operand 0, single buffered']
    #allocation11 [shape = 'u8[4096]{0}', space=vmem, size = 0x1000, scoped, tag = 'output window, operand 1, single buffered']
    #allocation12 [shape = 's32[1]{0}', space=sflag, size = 0x4, scoped, tag = 'scoped memory for tpu_custom_call.1']
    #allocation13 [shape = 'u8[4096]{0}', space=vmem, size = 0x1000, scoped, tag = 'output window, operand 2, single buffered']
    %12 = vsyncpa [#allocation3], 0
    %13 = vsyncpa [#allocation6], 0
    %14 = vsyncpa [#allocation9], 0
    %15 = vsyncpa [#allocation4], 0
    %16 = vsyncpa [#allocation12], 0
    // Predicated region
    $region2: #{tpu_custom_call.1} parent=1 // pred_check
      _
    $region3: #{tpu_custom_call.1} parent=1 // pred_check_branch
      %18 = sbr.rel (0) target = $region5
    $region4: #{tpu_custom_call.1} parent=1 // pred_region
      %20 = vsyncadd [#allocation3], 0
      %s22 = sshll.u32 %s0, 4
      %s23 = int_to_ptr.hbm [resolvable:$true] %s22
      %s24 = sshll.u32 [#allocation2], 4
      %s25 = int_to_ptr.vmem [resolvable:$true] %s24
      %27 = dma.hbm_to_vmem [thread:$0]  %s23, 128, %s25, [#allocation3]
    $region5: #{tpu_custom_call.1} parent=1 // pred_fallthru
      _
    // Predicated region
    $region6: #{tpu_custom_call.1} parent=1 // pred_check
      _
    $region7: #{tpu_custom_call.1} parent=1 // pred_check_branch
      %29 = sbr.rel (0) target = $region9
    $region8: #{tpu_custom_call.1} parent=1 // pred_region
      %31 = vsyncadd [#allocation6], 0
      %s33 = sshll.u32 %s1, 4
      %s34 = int_to_ptr.hbm [resolvable:$true] %s33
      %s35 = sshll.u32 [#allocation5], 4
      %s36 = int_to_ptr.vmem [resolvable:$true] %s35
      %38 = dma.hbm_to_vmem [thread:$0]  %s34, 128, %s36, [#allocation6]
    $region9: #{tpu_custom_call.1} parent=1 // pred_fallthru
      _
    // Predicated region
    $region10: #{tpu_custom_call.1} parent=1 // pred_check
      _
    $region11: #{tpu_custom_call.1} parent=1 // pred_check_branch
      %40 = sbr.rel (0) target = $region13
    $region12: #{tpu_custom_call.1} parent=1 // pred_region
      %42 = vsyncadd [#allocation6], 0
      %s44 = sshll.u32 %s2, 4
      %s45 = int_to_ptr.hbm [resolvable:$true] %s44
      %s46 = sshll.u32 [#allocation7], 4
      %s47 = int_to_ptr.vmem [resolvable:$true] %s46
      %49 = dma.hbm_to_vmem [thread:$0]  %s45, 128, %s47, [#allocation6]
    $region13: #{tpu_custom_call.1} parent=1 // pred_fallthru
      _
    // Predicated region
    $region14: #{tpu_custom_call.1} parent=1 // pred_check
      _
    $region15: #{tpu_custom_call.1} parent=1 // pred_check_branch
      %51 = sbr.rel (0) target = $region17
    $region16: #{tpu_custom_call.1} parent=1 // pred_region
      %53 = vsyncadd [#allocation9], 0
      %s54 = sshll.u32 %s3, 4
      %s55 = int_to_ptr.hbm [resolvable:$true] %s54
      %s56 = sshll.u32 [#allocation8], 4
      %s57 = int_to_ptr.vmem [resolvable:$true] %s56
      %62 = dma.hbm_to_vmem [thread:$0]  %s55, 16768, %s57, [#allocation9], 128, 128, 8
    $region17: #{tpu_custom_call.1} parent=1 // pred_fallthru
      _
    // Predicated region
    $region18: #{tpu_custom_call.1} parent=1 // pred_check
      _
    $region19: #{tpu_custom_call.1} parent=1 // pred_check_branch
      %64 = sbr.rel (0) target = $region21
    $region20: #{tpu_custom_call.1} parent=1 // pred_region
      %66 = dma.done [#allocation3], 128
    $region21: #{tpu_custom_call.1} parent=1 // pred_fallthru
      _
    // Predicated region
    $region22: #{tpu_custom_call.1} parent=1 // pred_check
      _
    $region23: #{tpu_custom_call.1} parent=1 // pred_check_branch
      %68 = sbr.rel (0) target = $region25
    $region24: #{tpu_custom_call.1} parent=1 // pred_region
      %70 = dma.done [#allocation6], 128
    $region25: #{tpu_custom_call.1} parent=1 // pred_fallthru
      _
    // Predicated region
    $region26: #{tpu_custom_call.1} parent=1 // pred_check
      _
    $region27: #{tpu_custom_call.1} parent=1 // pred_check_branch
      %72 = sbr.rel (0) target = $region29
    $region28: #{tpu_custom_call.1} parent=1 // pred_region
      %74 = dma.done [#allocation6], 128
    $region29: #{tpu_custom_call.1} parent=1 // pred_fallthru
      _
    // Predicated region
    $region30: #{tpu_custom_call.1} parent=1 // pred_check
      _
    $region31: #{tpu_custom_call.1} parent=1 // pred_check_branch
      %76 = sbr.rel (0) target = $region33
    $region32: #{tpu_custom_call.1} parent=1 // pred_region
      %78 = dma.done [#allocation9], 16768
    $region33: #{tpu_custom_call.1} parent=1 // pred_fallthru
      _
    %v79 = vld [vmem:[#allocation2] sm:$0xff]
    %v80 = vld [vmem:[#allocation5] sm:$0xff]
    %v81 = vld [vmem:[#allocation7] sm:$0xff]
    %v82 = vld [vmem:[#allocation8] sm:$0xff]
    %v83 = vld [vmem:[#allocation8 + $0x8] sm:$0xff]
    %v84 = vld [vmem:[#allocation8 + $0x10] sm:$0xff]
    %v85 = vld [vmem:[#allocation8 + $0x18] sm:$0xff]
    %vm86 = vcmask 130048
    %v88 = vsel %vm86, %v80, 0
    %90 = vmatpush.msra.mxu0 0.0
    %91 = vmatpush.msra.mxu0 0.0
    %92 = vmatpush.msra.mxu0 0.0
    %93 = vmatpush.msra.mxu0 0.0
    %94 = vmatpush.msra.mxu0 0.0
    %95 = vmatpush.msra.mxu0 0.0
    %96 = vmatpush.msra.mxu0 0.0
    %97 = vmatpush.msra.mxu0 0.0
    %98 = vmatpush.msra.mxu0 0.0
    %99 = vmatpush.msra.mxu0 0.0
    %100 = vmatpush.msra.mxu0 0.0
    %101 = vmatpush.msra.mxu0 0.0
    %102 = vmatpush.msra.mxu0 0.0
    %103 = vmatpush.msra.mxu0 0.0
    %104 = vmatpush.msra.mxu0 %v85
    %105 = vmatpush.msra.mxu0 %v84
    %106 = vmatmul.f32.gmra.mxu0 %v88
    %v107 = vpop.f32.mrf.mxu0
    %v108 = vadd.f32 0.0, %v107
    %109 = vdwg.mxu0
    %v111 = vsel %vm86, %v79, 0
    %113 = vmatpush.msra.mxu0 0.0
    %114 = vmatpush.msra.mxu0 0.0
    %115 = vmatpush.msra.mxu0 0.0
    %116 = vmatpush.msra.mxu0 0.0
    %117 = vmatpush.msra.mxu0 0.0
    %118 = vmatpush.msra.mxu0 0.0
    %119 = vmatpush.msra.mxu0 0.0
    %120 = vmatpush.msra.mxu0 0.0
    %121 = vmatpush.msra.mxu0 0.0
    %122 = vmatpush.msra.mxu0 0.0
    %123 = vmatpush.msra.mxu0 0.0
    %124 = vmatpush.msra.mxu0 0.0
    %125 = vmatpush.msra.mxu0 0.0
    %126 = vmatpush.msra.mxu0 0.0
    %127 = vmatpush.msra.mxu0 %v83
    %128 = vmatpush.msra.mxu0 %v82
    %129 = vmatmul.f32.gmra.mxu0 %v111
    %v130 = vpop.f32.mrf.mxu0
    %v131 = vadd.f32 %v108, %v130
    %132 = vdwg.mxu0
    %v133 = vrot.slane %v131, 4
    %v134 = vadd.f32 %v131, %v133
    %v135 = vrot.slane %v134, 2
    %v136 = vadd.f32 %v134, %v135
    %v137 = vrot.slane %v136, 1
    %v138 = vadd.f32 %v136, %v137
    %v139 = vmul.f32 %v138, 0.125
    %v140 = vmul.f32 %v131, %v131
    %v141 = vrot.slane %v140, 4
    %v142 = vadd.f32 %v140, %v141
    %v143 = vrot.slane %v142, 2
    %v144 = vadd.f32 %v142, %v143
    %v145 = vrot.slane %v144, 1
    %v146 = vadd.f32 %v144, %v145
    %v147 = vmul.f32 %v146, 0.125
    %v148 = vmul.f32 %v139, %v139
    %v149 = vsub.f32 %v147, %v148
    %v150 = vsub.f32 %v131, %v139
    %v151 = vadd.f32 %v149, 1e-05
    %v152 = vrsqrt.pop %v151
    %v153 = vmul.f32 %v152, %v151
    %v154 = vmul.f32 %v153, %v152
    %v155 = vmul.f32 0.5, %v154
    %v156 = vsub.f32 1.5, %v155
    %v157 = vmul.f32 %v152, %v156
    %vm158 = vweird.f32 %v151
    %vm159 = vweird.f32 %v152
    %vm160 = vmor %vm158, %vm159
    %v161 = vsel %vm160, %v152, %v157
    %v162 = vmul.f32 %v150, %v161
    %v163 = vld [vmem:[#allocation8 + $0x20] sm:$0x1]
    %v164 = vperm.slane %v163, 0
    %v165 = vmul.f32 %v162, %v164
    %v166 = vld [vmem:[#allocation8 + $0x28] sm:$0x1]
    %v167 = vperm.slane %v166, 0
    %v168 = vadd.f32 %v165, %v167
    %v169 = vmax.f32 %v168, 0.0
    %v170 = vld [vmem:[#allocation8 + $0x30] sm:$0xff]
    %v171 = vld [vmem:[#allocation8 + $0x38] sm:$0xff]
    %v172 = vld [vmem:[#allocation8 + $0x40] sm:$0xff]
    %v173 = vld [vmem:[#allocation8 + $0x48] sm:$0xff]
    %v174 = vld [vmem:[#allocation8 + $0x50] sm:$0xff]
    %v175 = vld [vmem:[#allocation8 + $0x58] sm:$0xff]
    %v176 = vld [vmem:[#allocation8 + $0x60] sm:$0xff]
    %v177 = vld [vmem:[#allocation8 + $0x68] sm:$0xff]
    %v178 = vld [vmem:[#allocation8 + $0x70] sm:$0xff]
    %v179 = vld [vmem:[#allocation8 + $0x78] sm:$0xff]
    %v180 = vld [vmem:[#allocation8 + $0x80] sm:$0xff]
    %v181 = vld [vmem:[#allocation8 + $0x88] sm:$0xff]
    %v182 = vld [vmem:[#allocation8 + $0x90] sm:$0xff]
    %v183 = vld [vmem:[#allocation8 + $0x98] sm:$0xff]
    %v184 = vld [vmem:[#allocation8 + $0xa0] sm:$0xff]
    %v185 = vld [vmem:[#allocation8 + $0xa8] sm:$0xff]
    %186 = vmatpush.msra.mxu0 %v185
    %187 = vmatpush.msra.mxu0 %v184
    %188 = vmatpush.msra.mxu0 %v183
    %189 = vmatpush.msra.mxu0 %v182
    %190 = vmatpush.msra.mxu0 %v181
    %191 = vmatpush.msra.mxu0 %v180
    %192 = vmatpush.msra.mxu0 %v179
    %193 = vmatpush.msra.mxu0 %v178
    %194 = vmatpush.msra.mxu0 %v177
    %195 = vmatpush.msra.mxu0 %v176
    %196 = vmatpush.msra.mxu0 %v175
    %197 = vmatpush.msra.mxu0 %v174
    %198 = vmatpush.msra.mxu0 %v173
    %199 = vmatpush.msra.mxu0 %v172
    %200 = vmatpush.msra.mxu0 %v171
    %201 = vmatpush.msra.mxu0 %v170
    %202 = vmatmul.f32.gmra.mxu0 %v169
    %v203 = vpop.f32.mrf.mxu0
    %v204 = vadd.f32 0.0, %v203
    %205 = vdwg.mxu0
    %v206 = vrot.slane %v204, 4
    %v207 = vadd.f32 %v204, %v206
    %v208 = vrot.slane %v207, 2
    %v209 = vadd.f32 %v207, %v208
    %v210 = vrot.slane %v209, 1
    %v211 = vadd.f32 %v209, %v210
    %v212 = vmul.f32 %v211, 0.125
    %v213 = vmul.f32 %v204, %v204
    %v214 = vrot.slane %v213, 4
    %v215 = vadd.f32 %v213, %v214
    %v216 = vrot.slane %v215, 2
    %v217 = vadd.f32 %v215, %v216
    %v218 = vrot.slane %v217, 1
    %v219 = vadd.f32 %v217, %v218
    %v220 = vmul.f32 %v219, 0.125
    %v221 = vmul.f32 %v212, %v212
    %v222 = vsub.f32 %v220, %v221
    %v223 = vsub.f32 %v204, %v212
    %v224 = vadd.f32 %v222, 1e-05
    %v225 = vrsqrt.pop %v224
    %v226 = vmul.f32 %v225, %v224
    %v227 = vmul.f32 %v226, %v225
    %v228 = vmul.f32 0.5, %v227
    %v229 = vsub.f32 1.5, %v228
    %v230 = vmul.f32 %v225, %v229
    %vm231 = vweird.f32 %v224
    %vm232 = vweird.f32 %v225
    %vm233 = vmor %vm231, %vm232
    %v234 = vsel %vm233, %v225, %v230
    %v235 = vmul.f32 %v223, %v234
    %v236 = vld [vmem:[#allocation8 + $0xb0] sm:$0x1]
    %v237 = vperm.slane %v236, 0
    %v238 = vmul.f32 %v235, %v237
    %v239 = vld [vmem:[#allocation8 + $0xb8] sm:$0x1]
    %v240 = vperm.slane %v239, 0
    %v241 = vadd.f32 %v238, %v240
    %v242 = vmax.f32 %v241, 0.0
    %v243 = vld [vmem:[#allocation8 + $0xc0] sm:$0xff]
    %v244 = vld [vmem:[#allocation8 + $0xc8] sm:$0xff]
    %v245 = vld [vmem:[#allocation8 + $0xd0] sm:$0xff]
    %v246 = vld [vmem:[#allocation8 + $0xd8] sm:$0xff]
    %v247 = vld [vmem:[#allocation8 + $0xe0] sm:$0xff]
    %v248 = vld [vmem:[#allocation8 + $0xe8] sm:$0xff]
    %v249 = vld [vmem:[#allocation8 + $0xf0] sm:$0xff]
    %v250 = vld [vmem:[#allocation8 + $0xf8] sm:$0xff]
    %v251 = vld [vmem:[#allocation8 + $0x100] sm:$0xff]
    %v252 = vld [vmem:[#allocation8 + $0x108] sm:$0xff]
    %v253 = vld [vmem:[#allocation8 + $0x110] sm:$0xff]
    %v254 = vld [vmem:[#allocation8 + $0x118] sm:$0xff]
    %v255 = vld [vmem:[#allocation8 + $0x120] sm:$0xff]
    %v256 = vld [vmem:[#allocation8 + $0x128] sm:$0xff]
    %v257 = vld [vmem:[#allocation8 + $0x130] sm:$0xff]
    %v258 = vld [vmem:[#allocation8 + $0x138] sm:$0xff]
    %259 = vmatpush.msra.mxu0 %v258
    %260 = vmatpush.msra.mxu0 %v257
    %261 = vmatpush.msra.mxu0 %v256
    %262 = vmatpush.msra.mxu0 %v255
    %263 = vmatpush.msra.mxu0 %v254
    %264 = vmatpush.msra.mxu0 %v253
    %265 = vmatpush.msra.mxu0 %v252
    %266 = vmatpush.msra.mxu0 %v251
    %267 = vmatpush.msra.mxu0 %v250
    %268 = vmatpush.msra.mxu0 %v249
    %269 = vmatpush.msra.mxu0 %v248
    %270 = vmatpush.msra.mxu0 %v247
    %271 = vmatpush.msra.mxu0 %v246
    %272 = vmatpush.msra.mxu0 %v245
    %273 = vmatpush.msra.mxu0 %v244
    %274 = vmatpush.msra.mxu0 %v243
    %275 = vmatmul.f32.gmra.mxu0 %v242
    %v276 = vpop.f32.mrf.mxu0
    %v277 = vadd.f32 0.0, %v276
    %278 = vdwg.mxu0
    %v279 = vrot.slane %v277, 4
    %v280 = vadd.f32 %v277, %v279
    %v281 = vrot.slane %v280, 2
    %v282 = vadd.f32 %v280, %v281
    %v283 = vrot.slane %v282, 1
    %v284 = vadd.f32 %v282, %v283
    %v285 = vmul.f32 %v284, 0.125
    %v286 = vmul.f32 %v277, %v277
    %v287 = vrot.slane %v286, 4
    %v288 = vadd.f32 %v286, %v287
    %v289 = vrot.slane %v288, 2
    %v290 = vadd.f32 %v288, %v289
    %v291 = vrot.slane %v290, 1
    %v292 = vadd.f32 %v290, %v291
    %v293 = vmul.f32 %v292, 0.125
    %v294 = vmul.f32 %v285, %v285
    %v295 = vsub.f32 %v293, %v294
    %v296 = vsub.f32 %v277, %v285
    %v297 = vadd.f32 %v295, 1e-05
    %v298 = vrsqrt.pop %v297
    %v299 = vmul.f32 %v298, %v297
    %v300 = vmul.f32 %v299, %v298
    %v301 = vmul.f32 0.5, %v300
    %v302 = vsub.f32 1.5, %v301
    %v303 = vmul.f32 %v298, %v302
    %vm304 = vweird.f32 %v297
    %vm305 = vweird.f32 %v298
    %vm306 = vmor %vm304, %vm305
    %v307 = vsel %vm306, %v298, %v303
    %v308 = vmul.f32 %v296, %v307
    %v309 = vld [vmem:[#allocation8 + $0x140] sm:$0x1]
    %v310 = vperm.slane %v309, 0
    %v311 = vmul.f32 %v308, %v310
    %v312 = vld [vmem:[#allocation8 + $0x148] sm:$0x1]
    %v313 = vperm.slane %v312, 0
    %v314 = vadd.f32 %v311, %v313
    %v315 = vmax.f32 %v314, 0.0
    %v316 = vld [vmem:[#allocation8 + $0x150] sm:$0xff]
    %v317 = vld [vmem:[#allocation8 + $0x158] sm:$0xff]
    %v318 = vld [vmem:[#allocation8 + $0x160] sm:$0xff]
    %v319 = vld [vmem:[#allocation8 + $0x168] sm:$0xff]
    %v320 = vld [vmem:[#allocation8 + $0x170] sm:$0xff]
    %v321 = vld [vmem:[#allocation8 + $0x178] sm:$0xff]
    %v322 = vld [vmem:[#allocation8 + $0x180] sm:$0xff]
    %v323 = vld [vmem:[#allocation8 + $0x188] sm:$0xff]
    %v324 = vld [vmem:[#allocation8 + $0x190] sm:$0xff]
    %v325 = vld [vmem:[#allocation8 + $0x198] sm:$0xff]
    %v326 = vld [vmem:[#allocation8 + $0x1a0] sm:$0xff]
    %v327 = vld [vmem:[#allocation8 + $0x1a8] sm:$0xff]
    %v328 = vld [vmem:[#allocation8 + $0x1b0] sm:$0xff]
    %v329 = vld [vmem:[#allocation8 + $0x1b8] sm:$0xff]
    %v330 = vld [vmem:[#allocation8 + $0x1c0] sm:$0xff]
    %v331 = vld [vmem:[#allocation8 + $0x1c8] sm:$0xff]
    %v332 = vld [vmem:[#allocation8 + $0x1d0] sm:$0x1]
    %v333 = vperm.slane %v332, 0
    %334 = vmatpush.msra.mxu0 %v331
    %335 = vmatpush.msra.mxu0 %v330
    %336 = vmatpush.msra.mxu0 %v329
    %337 = vmatpush.msra.mxu0 %v328
    %338 = vmatpush.msra.mxu0 %v327
    %339 = vmatpush.msra.mxu0 %v326
    %340 = vmatpush.msra.mxu0 %v325
    %341 = vmatpush.msra.mxu0 %v324
    %342 = vmatpush.msra.mxu0 %v323
    %343 = vmatpush.msra.mxu0 %v322
    %344 = vmatpush.msra.mxu0 %v321
    %345 = vmatpush.msra.mxu0 %v320
    %346 = vmatpush.msra.mxu0 %v319
    %347 = vmatpush.msra.mxu0 %v318
    %348 = vmatpush.msra.mxu0 %v317
    %349 = vmatpush.msra.mxu0 %v316
    %350 = vmatmul.f32.gmra.mxu0 %v315
    %v351 = vpop.f32.mrf.mxu0
    %v352 = vadd.f32 %v333, %v351
    %353 = vdwg.mxu0
    %v354 = vld [vmem:[#allocation8 + $0x1d8] sm:$0xff]
    %v355 = vld [vmem:[#allocation8 + $0x1e0] sm:$0xff]
    %v356 = vld [vmem:[#allocation8 + $0x1e8] sm:$0xff]
    %v357 = vld [vmem:[#allocation8 + $0x1f0] sm:$0xff]
    %v358 = vld [vmem:[#allocation8 + $0x1f8] sm:$0xff]
    %v359 = vld [vmem:[#allocation8 + $0x200] sm:$0xff]
    %v360 = vld [vmem:[#allocation8 + $0x208] sm:$0xff]
    %v361 = vld [vmem:[#allocation8 + $0x210] sm:$0xff]
    %v362 = vld [vmem:[#allocation8 + $0x218] sm:$0xff]
    %v363 = vld [vmem:[#allocation8 + $0x220] sm:$0xff]
    %v364 = vld [vmem:[#allocation8 + $0x228] sm:$0xff]
    %v365 = vld [vmem:[#allocation8 + $0x230] sm:$0xff]
    %v366 = vld [vmem:[#allocation8 + $0x238] sm:$0xff]
    %v367 = vld [vmem:[#allocation8 + $0x240] sm:$0xff]
    %v368 = vld [vmem:[#allocation8 + $0x248] sm:$0xff]
    %v369 = vld [vmem:[#allocation8 + $0x250] sm:$0xff]
    %370 = vmatpush.msra.mxu0 %v369
    %371 = vmatpush.msra.mxu0 %v368
    %372 = vmatpush.msra.mxu0 %v367
    %373 = vmatpush.msra.mxu0 %v366
    %374 = vmatpush.msra.mxu0 %v365
    %375 = vmatpush.msra.mxu0 %v364
    %376 = vmatpush.msra.mxu0 %v363
    %377 = vmatpush.msra.mxu0 %v362
    %378 = vmatpush.msra.mxu0 %v361
    %379 = vmatpush.msra.mxu0 %v360
    %380 = vmatpush.msra.mxu0 %v359
    %381 = vmatpush.msra.mxu0 %v358
    %382 = vmatpush.msra.mxu0 %v357
    %383 = vmatpush.msra.mxu0 %v356
    %384 = vmatpush.msra.mxu0 %v355
    %385 = vmatpush.msra.mxu0 %v354
    %386 = vmatmul.f32.gmra.mxu0 %v242
    %v387 = vpop.f32.mrf.mxu0
    %v388 = vadd.f32 0.0, %v387
    %389 = vdwg.mxu0
    %v390 = vrot.slane %v388, 4
    %v391 = vadd.f32 %v388, %v390
    %v392 = vrot.slane %v391, 2
    %v393 = vadd.f32 %v391, %v392
    %v394 = vrot.slane %v393, 1
    %v395 = vadd.f32 %v393, %v394
    %v396 = vmul.f32 %v395, 0.125
    %v397 = vmul.f32 %v388, %v388
    %v398 = vrot.slane %v397, 4
    %v399 = vadd.f32 %v397, %v398
    %v400 = vrot.slane %v399, 2
    %v401 = vadd.f32 %v399, %v400
    %v402 = vrot.slane %v401, 1
    %v403 = vadd.f32 %v401, %v402
    %v404 = vmul.f32 %v403, 0.125
    %v405 = vmul.f32 %v396, %v396
    %v406 = vsub.f32 %v404, %v405
    %v407 = vsub.f32 %v388, %v396
    %v408 = vadd.f32 %v406, 1e-05
    %v409 = vrsqrt.pop %v408
    %v410 = vmul.f32 %v409, %v408
    %v411 = vmul.f32 %v410, %v409
    %v412 = vmul.f32 0.5, %v411
    %v413 = vsub.f32 1.5, %v412
    %v414 = vmul.f32 %v409, %v413
    %vm415 = vweird.f32 %v408
    %vm416 = vweird.f32 %v409
    %vm417 = vmor %vm415, %vm416
    %v418 = vsel %vm417, %v409, %v414
    %v419 = vmul.f32 %v407, %v418
    %v420 = vld [vmem:[#allocation8 + $0x258] sm:$0x1]
    %v421 = vperm.slane %v420, 0
    %v422 = vmul.f32 %v419, %v421
    %v423 = vld [vmem:[#allocation8 + $0x260] sm:$0x1]
    %v424 = vperm.slane %v423, 0
    %v425 = vadd.f32 %v422, %v424
    %v426 = vmax.f32 %v425, 0.0
    %v427 = vld [vmem:[#allocation8 + $0x268] sm:$0xff]
    %v428 = vld [vmem:[#allocation8 + $0x270] sm:$0xff]
    %v429 = vld [vmem:[#allocation8 + $0x278] sm:$0xff]
    %v430 = vld [vmem:[#allocation8 + $0x280] sm:$0xff]
    %v431 = vld [vmem:[#allocation8 + $0x288] sm:$0xff]
    %v432 = vld [vmem:[#allocation8 + $0x290] sm:$0xff]
    %v433 = vld [vmem:[#allocation8 + $0x298] sm:$0xff]
    %v434 = vld [vmem:[#allocation8 + $0x2a0] sm:$0xff]
    %v435 = vld [vmem:[#allocation8 + $0x2a8] sm:$0xff]
    %v436 = vld [vmem:[#allocation8 + $0x2b0] sm:$0xff]
    %v437 = vld [vmem:[#allocation8 + $0x2b8] sm:$0xff]
    %v438 = vld [vmem:[#allocation8 + $0x2c0] sm:$0xff]
    %v439 = vld [vmem:[#allocation8 + $0x2c8] sm:$0xff]
    %v440 = vld [vmem:[#allocation8 + $0x2d0] sm:$0xff]
    %v441 = vld [vmem:[#allocation8 + $0x2d8] sm:$0xff]
    %v442 = vld [vmem:[#allocation8 + $0x2e0] sm:$0xff]
    %v443 = vld [vmem:[#allocation8 + $0x2e8] sm:$0x1]
    %v444 = vperm.slane %v443, 0
    %445 = vmatpush.msra.mxu0 %v442
    %446 = vmatpush.msra.mxu0 %v441
    %447 = vmatpush.msra.mxu0 %v440
    %448 = vmatpush.msra.mxu0 %v439
    %449 = vmatpush.msra.mxu0 %v438
    %450 = vmatpush.msra.mxu0 %v437
    %451 = vmatpush.msra.mxu0 %v436
    %452 = vmatpush.msra.mxu0 %v435
    %453 = vmatpush.msra.mxu0 %v434
    %454 = vmatpush.msra.mxu0 %v433
    %455 = vmatpush.msra.mxu0 %v432
    %456 = vmatpush.msra.mxu0 %v431
    %457 = vmatpush.msra.mxu0 %v430
    %458 = vmatpush.msra.mxu0 %v429
    %459 = vmatpush.msra.mxu0 %v428
    %460 = vmatpush.msra.mxu0 %v427
    %461 = vmatmul.f32.gmra.mxu0 %v426
    %v462 = vpop.f32.mrf.mxu0
    %v463 = vadd.f32 %v444, %v462
    %464 = vdwg.mxu0
    %v465 = vmul.f32 %v463, 0.5
    %v466 = vmul.f32 %v465, 1.442695
    %v467 = vpow.pop %v466
    %v468 = vmul.f32 %v81, %v467
    %v469 = vadd.f32 %v352, %v468
    %v470 = vld [vmem:[#allocation8 + $0x2f0] sm:$0xff]
    %v471 = vld [vmem:[#allocation8 + $0x2f8] sm:$0xff]
    %v472 = vld [vmem:[#allocation8 + $0x300] sm:$0xff]
    %v473 = vld [vmem:[#allocation8 + $0x308] sm:$0xff]
    %v474 = vld [vmem:[#allocation8 + $0x310] sm:$0xff]
    %v475 = vld [vmem:[#allocation8 + $0x318] sm:$0xff]
    %v476 = vld [vmem:[#allocation8 + $0x320] sm:$0xff]
    %v477 = vld [vmem:[#allocation8 + $0x328] sm:$0xff]
    %v478 = vld [vmem:[#allocation8 + $0x330] sm:$0xff]
    %v479 = vld [vmem:[#allocation8 + $0x338] sm:$0xff]
    %v480 = vld [vmem:[#allocation8 + $0x340] sm:$0xff]
    %v481 = vld [vmem:[#allocation8 + $0x348] sm:$0xff]
    %v482 = vld [vmem:[#allocation8 + $0x350] sm:$0xff]
    %v483 = vld [vmem:[#allocation8 + $0x358] sm:$0xff]
    %v484 = vld [vmem:[#allocation8 + $0x360] sm:$0xff]
    %v485 = vld [vmem:[#allocation8 + $0x368] sm:$0xff]
    %v486 = vld [vmem:[#allocation8 + $0x370] sm:$0xff]
    %v487 = vld [vmem:[#allocation8 + $0x378] sm:$0xff]
    %488 = vmatpush.msra.mxu0 0.0
    %489 = vmatpush.msra.mxu0 0.0
    %490 = vmatpush.msra.mxu0 0.0
    %491 = vmatpush.msra.mxu0 0.0
    %492 = vmatpush.msra.mxu0 0.0
    %493 = vmatpush.msra.mxu0 0.0
    %494 = vmatpush.msra.mxu0 0.0
    %495 = vmatpush.msra.mxu0 0.0
    %496 = vmatpush.msra.mxu0 0.0
    %497 = vmatpush.msra.mxu0 0.0
    %498 = vmatpush.msra.mxu0 0.0
    %499 = vmatpush.msra.mxu0 0.0
    %500 = vmatpush.msra.mxu0 0.0
    %501 = vmatpush.msra.mxu0 0.0
    %502 = vmatpush.msra.mxu0 %v487
    %503 = vmatpush.msra.mxu0 %v486
    %504 = vmatmul.f32.gmra.mxu0 %v88
    %v505 = vpop.f32.mrf.mxu0
    %v506 = vadd.f32 0.0, %v505
    %507 = vdwg.mxu0
    %508 = vmatpush.msra.mxu0 %v485
    %509 = vmatpush.msra.mxu0 %v484
    %510 = vmatpush.msra.mxu0 %v483
    %511 = vmatpush.msra.mxu0 %v482
    %512 = vmatpush.msra.mxu0 %v481
    %513 = vmatpush.msra.mxu0 %v480
    %514 = vmatpush.msra.mxu0 %v479
    %515 = vmatpush.msra.mxu0 %v478
    %516 = vmatpush.msra.mxu0 %v477
    %517 = vmatpush.msra.mxu0 %v476
    %518 = vmatpush.msra.mxu0 %v475
    %519 = vmatpush.msra.mxu0 %v474
    %520 = vmatpush.msra.mxu0 %v473
    %521 = vmatpush.msra.mxu0 %v472
    %522 = vmatpush.msra.mxu0 %v471
    %523 = vmatpush.msra.mxu0 %v470
    %524 = vmatmul.f32.gmra.mxu0 %v469
    %v525 = vpop.f32.mrf.mxu0
    %v526 = vadd.f32 %v506, %v525
    %527 = vdwg.mxu0
    %v528 = vrot.slane %v526, 4
    %v529 = vadd.f32 %v526, %v528
    %v530 = vrot.slane %v529, 2
    %v531 = vadd.f32 %v529, %v530
    %v532 = vrot.slane %v531, 1
    %v533 = vadd.f32 %v531, %v532
    %v534 = vmul.f32 %v533, 0.125
    %v535 = vmul.f32 %v526, %v526
    %v536 = vrot.slane %v535, 4
    %v537 = vadd.f32 %v535, %v536
    %v538 = vrot.slane %v537, 2
    %v539 = vadd.f32 %v537, %v538
    %v540 = vrot.slane %v539, 1
    %v541 = vadd.f32 %v539, %v540
    %v542 = vmul.f32 %v541, 0.125
    %v543 = vmul.f32 %v534, %v534
    %v544 = vsub.f32 %v542, %v543
    %v545 = vsub.f32 %v526, %v534
    %v546 = vadd.f32 %v544, 1e-05
    %v547 = vrsqrt.pop %v546
    %v548 = vmul.f32 %v547, %v546
    %v549 = vmul.f32 %v548, %v547
    %v550 = vmul.f32 0.5, %v549
    %v551 = vsub.f32 1.5, %v550
    %v552 = vmul.f32 %v547, %v551
    %vm553 = vweird.f32 %v546
    %vm554 = vweird.f32 %v547
    %vm555 = vmor %vm553, %vm554
    %v556 = vsel %vm555, %v547, %v552
    %v557 = vmul.f32 %v545, %v556
    %v558 = vld [vmem:[#allocation8 + $0x380] sm:$0x1]
    %v559 = vperm.slane %v558, 0
    %v560 = vmul.f32 %v557, %v559
    %v561 = vld [vmem:[#allocation8 + $0x388] sm:$0x1]
    %v562 = vperm.slane %v561, 0
    %v563 = vadd.f32 %v560, %v562
    %v564 = vmax.f32 %v563, 0.0
    %v565 = vld [vmem:[#allocation8 + $0x390] sm:$0xff]
    %v566 = vld [vmem:[#allocation8 + $0x398] sm:$0xff]
    %v567 = vld [vmem:[#allocation8 + $0x3a0] sm:$0xff]
    %v568 = vld [vmem:[#allocation8 + $0x3a8] sm:$0xff]
    %v569 = vld [vmem:[#allocation8 + $0x3b0] sm:$0xff]
    %v570 = vld [vmem:[#allocation8 + $0x3b8] sm:$0xff]
    %v571 = vld [vmem:[#allocation8 + $0x3c0] sm:$0xff]
    %v572 = vld [vmem:[#allocation8 + $0x3c8] sm:$0xff]
    %v573 = vld [vmem:[#allocation8 + $0x3d0] sm:$0xff]
    %v574 = vld [vmem:[#allocation8 + $0x3d8] sm:$0xff]
    %v575 = vld [vmem:[#allocation8 + $0x3e0] sm:$0xff]
    %v576 = vld [vmem:[#allocation8 + $0x3e8] sm:$0xff]
    %v577 = vld [vmem:[#allocation8 + $0x3f0] sm:$0xff]
    %v578 = vld [vmem:[#allocation8 + $0x3f8] sm:$0xff]
    %v579 = vld [vmem:[#allocation8 + $0x400] sm:$0xff]
    %v580 = vld [vmem:[#allocation8 + $0x408] sm:$0xff]
    %v581 = vld [vmem:[#allocation8 + $0x410] sm:$0x1]
    %v582 = vperm.slane %v581, 0
    %583 = vmatpush.msra.mxu0 %v580
    %584 = vmatpush.msra.mxu0 %v579
    %585 = vmatpush.msra.mxu0 %v578
    %586 = vmatpush.msra.mxu0 %v577
    %587 = vmatpush.msra.mxu0 %v576
    %588 = vmatpush.msra.mxu0 %v575
    %589 = vmatpush.msra.mxu0 %v574
    %590 = vmatpush.msra.mxu0 %v573
    %591 = vmatpush.msra.mxu0 %v572
    %592 = vmatpush.msra.mxu0 %v571
    %593 = vmatpush.msra.mxu0 %v570
    %594 = vmatpush.msra.mxu0 %v569
    %595 = vmatpush.msra.mxu0 %v568
    %596 = vmatpush.msra.mxu0 %v567
    %597 = vmatpush.msra.mxu0 %v566
    %598 = vmatpush.msra.mxu0 %v565
    %599 = vmatmul.f32.gmra.mxu0 %v564
    %v600 = vpop.f32.mrf.mxu0
    %v601 = vadd.f32 %v582, %v600
    %602 = vdwg.mxu0
    %603 = vst [vmem:[#allocation10] sm:$0xff] %v601
    %604 = vst [vmem:[#allocation11] sm:$0xff] %v352
    %605 = vst [vmem:[#allocation13] sm:$0xff] %v463
    // Predicated region
    $region34: #{tpu_custom_call.1} parent=1 // pred_check
      _
    $region35: #{tpu_custom_call.1} parent=1 // pred_check_branch
      %607 = sbr.rel (0) target = $region37
    $region36: #{tpu_custom_call.1} parent=1 // pred_region
      %609 = vsyncadd [#allocation4], 0
      %s611 = sshll.u32 [#allocation10], 4
      %s612 = int_to_ptr.vmem [resolvable:$true] %s611
      %s613 = sshll.u32 %s4, 4
      %s614 = int_to_ptr.hbm [resolvable:$true] %s613
      %616 = dma.vmem_to_hbm [thread:$0]  %s612, 128, %s614, [#allocation4]
    $region37: #{tpu_custom_call.1} parent=1 // pred_fallthru
      _
    // Predicated region
    $region38: #{tpu_custom_call.1} parent=1 // pred_check
      _
    $region39: #{tpu_custom_call.1} parent=1 // pred_check_branch
      %618 = sbr.rel (0) target = $region41
    $region40: #{tpu_custom_call.1} parent=1 // pred_region
      %620 = vsyncadd [#allocation12], 0
      %s622 = sshll.u32 [#allocation11], 4
      %s623 = int_to_ptr.vmem [resolvable:$true] %s622
      %s624 = sshll.u32 %s5, 4
      %s625 = int_to_ptr.hbm [resolvable:$true] %s624
      %627 = dma.vmem_to_hbm [thread:$0]  %s623, 128, %s625, [#allocation12]
    $region41: #{tpu_custom_call.1} parent=1 // pred_fallthru
      _
    // Predicated region
    $region42: #{tpu_custom_call.1} parent=1 // pred_check
      _
    $region43: #{tpu_custom_call.1} parent=1 // pred_check_branch
      %629 = sbr.rel (0) target = $region45
    $region44: #{tpu_custom_call.1} parent=1 // pred_region
      %631 = vsyncadd [#allocation12], 0
      %s633 = sshll.u32 [#allocation13], 4
      %s634 = int_to_ptr.vmem [resolvable:$true] %s633
      %s635 = sshll.u32 %s6, 4
      %s636 = int_to_ptr.hbm [resolvable:$true] %s635
      %638 = dma.vmem_to_hbm [thread:$0]  %s634, 128, %s636, [#allocation12]
    $region45: #{tpu_custom_call.1} parent=1 // pred_fallthru
      _
    // Predicated region
    $region46: #{tpu_custom_call.1} parent=1 // pred_check
      _
    $region47: #{tpu_custom_call.1} parent=1 // pred_check_branch
      %640 = sbr.rel (0) target = $region49
    $region48: #{tpu_custom_call.1} parent=1 // pred_region
      %642 = dma.done [#allocation4], 128
    $region49: #{tpu_custom_call.1} parent=1 // pred_fallthru
      _
    // Predicated region
    $region50: #{tpu_custom_call.1} parent=1 // pred_check
      _
    $region51: #{tpu_custom_call.1} parent=1 // pred_check_branch
      %644 = sbr.rel (0) target = $region53
    $region52: #{tpu_custom_call.1} parent=1 // pred_region
      %646 = dma.done [#allocation12], 128
    $region53: #{tpu_custom_call.1} parent=1 // pred_fallthru
      _
    // Predicated region
    $region54: #{tpu_custom_call.1} parent=1 // pred_check
      _
    $region55: #{tpu_custom_call.1} parent=1 // pred_check_branch
      %648 = sbr.rel (0) target = $region57
    $region56: #{tpu_custom_call.1} parent=1 // pred_region
      %650 = dma.done [#allocation12], 128
    $region57: #{tpu_custom_call.1} parent=1 // pred_fallthru
      _
    %651 = vsyncpa [#allocation3], 1
    %652 = vsyncpa [#allocation6], 1
    %653 = vsyncpa [#allocation9], 1
    %654 = vsyncpa [#allocation4], 1
    %655 = vsyncpa [#allocation12], 1

</llo_original>
